<compile_context>
chip_gen: v5e
topology: v5e:2x2
jax: 0.10.0
libtpu: 0.0.40
codegen_flags: <defaults>
</compile_context>

<pallas_src>
import functools

import jax
import jax.numpy as jnp
from jax.experimental import pallas as pl
from jax.experimental.pallas import tpu as pltpu


def _mix_seg_stats_kernel(pred_ref, tgt_ref, stats_ref, *, hw, p_tile, masked):
    """Accumulate per-class CE / dice statistics for one (image, pixel-tile).

    pred_ref : (1, C, P_TILE) logits block (any float dtype; cast to f32 here)
    tgt_ref  : (1, 1, P_TILE) int32 labels block
    stats_ref: (1, C, 4) f32 resident accumulator block for the current image:
               col 0 = sum_p probs*onehot   (intersection)
               col 1 = sum_p probs
               col 2 = sum_p onehot
               col 3 = sum_{p: target==c} (lse - z_c)   (per-class CE sum)
    """
    j = pl.program_id(1)

    logits = pred_ref[0].astype(jnp.float32)          # (C, P)
    tgt = tgt_ref[0]                                  # (1, P) int32
    C, P = logits.shape

    # --- softmax pieces: 1 exp / element, 1 log + 1 reciprocal / pixel -----
    m = jnp.max(logits, axis=0, keepdims=True)        # (1, P)
    z = logits - m                                    # (C, P)
    ez = jnp.exp(z)                                   # (C, P)
    se = jnp.sum(ez, axis=0, keepdims=True)           # (1, P)
    lse = jnp.log(se)                                 # (1, P)
    probs = ez * pl.reciprocal(se, approx=False)      # (C, P)

    # --- one-hot targets & (optional) valid-pixel mask ---------------------
    class_ids = jax.lax.broadcasted_iota(jnp.int32, (C, P), 0)
    hit = class_ids == tgt                            # (C, P) bool
    if masked:
        lane = jax.lax.broadcasted_iota(jnp.int32, (1, P), 1)
        valid = (j * p_tile + lane) < hw              # (1, P) bool
        hit = hit & valid
        probs = jnp.where(valid, probs, 0.0)          # select: NaN-safe padding
    onehot = jnp.where(hit, 1.0, 0.0)                 # (C, P) f32

    # --- per-tile partial statistics (lane reductions) ----------------------
    inter = jnp.sum(probs * onehot, axis=1, keepdims=True)   # (C, 1)
    psum = jnp.sum(probs, axis=1, keepdims=True)             # (C, 1)
    osum = jnp.sum(onehot, axis=1, keepdims=True)            # (C, 1)
    # per-class CE: sum over pixels whose target is this class of (lse - z_c).
    ce_col = jnp.sum(jnp.where(hit, lse - z, 0.0), axis=1, keepdims=True)

    tile_stats = jnp.concatenate([inter, psum, osum, ce_col], axis=1)  # (C, 4)

    @pl.when(j == 0)
    def _():
        stats_ref[...] = jnp.zeros_like(stats_ref)

    stats_ref[0] += tile_stats


def mix_seg_loss(pred_nchw, target_nhw, losses_weight=(1.0, 1.0), eps=1.0,
                 p_tile_max=16384):
    """JAX wrapper reproducing MixSegLoss.forward for [CE, Dice] sub-losses.

    Returns {loss_name: weighted scalar loss}, like the PyTorch module.
    """
    assert p_tile_max % 128 == 0, "p_tile_max must be a multiple of 128"
    N, C, H, W = pred_nchw.shape
    HW = H * W

    # Pure reshapes (no transpose, no data movement in HBM).
    pred = pred_nchw.reshape(N, C, HW)
    tgt = target_nhw.reshape(N, 1, HW).astype(jnp.int32)

    if HW <= p_tile_max:
        p_tile = HW                      # single full-extent tile (always legal)
    else:
        p_tile = p_tile_max              # multiple of 128 -> legal lane tiling
    num_tiles = pl.cdiv(HW, p_tile)
    masked = (num_tiles * p_tile != HW)  # last tile is partial -> mask in-kernel

    kernel = functools.partial(
        _mix_seg_stats_kernel, hw=HW, p_tile=p_tile, masked=masked)

    stats = pl.pallas_call(
        kernel,
        out_shape=jax.ShapeDtypeStruct((N, C, 4), jnp.float32),
        grid=(N, num_tiles),
        in_specs=[
            pl.BlockSpec((1, C, p_tile), lambda n, j: (n, 0, j)),
            pl.BlockSpec((1, 1, p_tile), lambda n, j: (n, 0, j)),
        ],
        out_specs=pl.BlockSpec((1, C, 4), lambda n, j: (n, 0, 0)),
        compiler_params=pltpu.CompilerParams(
            dimension_semantics=("parallel", "arbitrary"),
            vmem_limit_bytes=32 * 1024 * 1024,
        ),
    )(pred, tgt)

    # Tiny finalize in plain JAX: global sums, CE normalization, dice, weights.
    s = jnp.sum(stats, axis=0)                       # (C, 4)
    inter, psum, osum, ce_c = s[:, 0], s[:, 1], s[:, 2], s[:, 3]
    ce = jnp.sum(ce_c) / jnp.float32(N * HW)
    dice = jnp.mean(1.0 - (2.0 * inter + eps) / (psum + osum + eps))

    w_ce = jnp.float32(losses_weight[0])
    w_dice = jnp.float32(losses_weight[1])
    return {"ce_loss": ce * w_ce, "dice_loss": dice * w_dice}


def _reference(pred_nchw, target_nhw, losses_weight=(1.0, 1.0), eps=1.0):
    """Pure-JAX reference of the same math (sanity check)."""
    N, C, H, W = pred_nchw.shape
    logits = jnp.transpose(pred_nchw, (0, 2, 3, 1)).reshape(-1, C).astype(jnp.float32)
    tgt = target_nhw.reshape(-1).astype(jnp.int32)
    logp = jax.nn.log_softmax(logits, axis=-1)
    probs = jnp.exp(logp)
    onehot = jax.nn.one_hot(tgt, C, dtype=jnp.float32)
    ce = -jnp.mean(jnp.sum(onehot * logp, axis=-1))
    inter = jnp.sum(probs * onehot, axis=0)
    denom = jnp.sum(probs, axis=0) + jnp.sum(onehot, axis=0)
    dice = jnp.mean(1.0 - (2.0 * inter + eps) / (denom + eps))
    return {"ce_loss": ce * losses_weight[0], "dice_loss": dice * losses_weight[1]}


if __name__ == "__main__":
    key = jax.random.PRNGKey(0)
    k1, k2, k3, k4, k5, k6 = jax.random.split(key, 6)

    def check(pred, target, lw, p_tile_max, name):
        res = mix_seg_loss(pred, target, lw, p_tile_max=p_tile_max)
        res = {k: jax.block_until_ready(v) for k, v in res.items()}
        ref = _reference(pred, target, lw)
        for k in res:
            assert jnp.allclose(res[k], ref[k], rtol=1e-4, atol=1e-5), (
                name, k, res[k], ref[k])

    # Case 1: multi-tile accumulation, evenly divisible (HW=256, tile=128).
    pred1 = jax.random.normal(k1, (2, 4, 16, 16), dtype=jnp.float32)
    tgt1 = jax.random.randint(k2, (2, 16, 16), 0, 4, dtype=jnp.int32)
    check(pred1, tgt1, (1.0, 0.5), 128, "even_tiles")

    # Case 2: partial last tile (HW=324 not a multiple of 128) + odd C.
    pred2 = jax.random.normal(k3, (2, 5, 18, 18), dtype=jnp.float32)
    tgt2 = jax.random.randint(k4, (2, 18, 18), 0, 5, dtype=jnp.int32)
    check(pred2, tgt2, (1.0, 1.0), 128, "masked_tail")

    # Case 3: single-tile path with bf16 logits (per-tile upcast inside kernel).
    pred3 = jax.random.normal(k5, (1, 3, 16, 16), dtype=jnp.float32).astype(jnp.bfloat16)
    tgt3 = jax.random.randint(k6, (1, 16, 16), 0, 3, dtype=jnp.int32)
    check(pred3, tgt3, (1.0, 1.0), 16384, "bf16_single_tile")

    print("KERNEL_OK")
</pallas_src>

<mosaic_0001>
module attributes {stable_mosaic.version = 11 : i64} {
  func.func @_mix_seg_stats_kernel(%arg0: i32, %arg1: i32, %arg2: memref<1x4x128xf32, #tpu.memory_space<vmem>>, %arg3: memref<1x1x128xi32, #tpu.memory_space<vmem>>, %arg4: memref<1x4x4xf32, #tpu.memory_space<vmem>>) attributes {dimension_semantics = [#tpu.dimension_semantics<parallel>, #tpu.dimension_semantics<arbitrary>], iteration_bounds = array<i64: 2, 2>, scalar_prefetch = 0 : i64, scratch_operands = 0 : i64, tpu.core_type = #tpu.core_type<tc>, window_params = [{transform_indices = @transform_0, window_bounds = array<i64: 1, 4, 128>}, {transform_indices = @transform_1, window_bounds = array<i64: 1, 1, 128>}, {transform_indices = @transform_2, window_bounds = array<i64: 1, 4, 4>}]} {
    %c0 = arith.constant 0 : index
    %c0_0 = arith.constant 0 : index
    %c0_1 = arith.constant 0 : index
    %0 = vector.load %arg2[%c0, %c0_0, %c0_1] : memref<1x4x128xf32, #tpu.memory_space<vmem>>, vector<1x4x128xf32>
    %1 = vector.shape_cast %0 : vector<1x4x128xf32> to vector<4x128xf32>
    %c0_2 = arith.constant 0 : index
    %c0_3 = arith.constant 0 : index
    %c0_4 = arith.constant 0 : index
    %2 = vector.load %arg3[%c0_2, %c0_3, %c0_4] : memref<1x1x128xi32, #tpu.memory_space<vmem>>, vector<1x1x128xi32>
    %3 = vector.shape_cast %2 : vector<1x1x128xi32> to vector<1x128xi32>
    %cst = arith.constant dense<0xFF800000> : vector<128xf32>
    %4 = vector.multi_reduction <maximumf>, %1, %cst [0] : vector<4x128xf32> to vector<128xf32>
    %5 = vector.shape_cast %4 : vector<128xf32> to vector<1x128xf32>
    %6 = vector.broadcast %5 : vector<1x128xf32> to vector<4x128xf32>
    %7 = arith.subf %1, %6 : vector<4x128xf32>
    %8 = math.exp %7 : vector<4x128xf32>
    %cst_5 = arith.constant dense<0.000000e+00> : vector<128xf32>
    %9 = vector.multi_reduction <add>, %8, %cst_5 [0] : vector<4x128xf32> to vector<128xf32>
    %10 = vector.shape_cast %9 : vector<128xf32> to vector<1x128xf32>
    %11 = math.log %10 : vector<1x128xf32>
    %12 = tpu.reciprocal %10 : vector<1x128xf32> -> vector<1x128xf32>
    %13 = vector.broadcast %12 : vector<1x128xf32> to vector<4x128xf32>
    %14 = arith.mulf %8, %13 : vector<4x128xf32>
    %15 = tpu.iota {dimensions = array<i32: 0>} : vector<4x128xi32>
    %16 = vector.broadcast %3 : vector<1x128xi32> to vector<4x128xi32>
    %17 = arith.cmpi eq, %15, %16 : vector<4x128xi32>
    %cst_6 = arith.constant 1.000000e+00 : f32
    %cst_7 = arith.constant 0.000000e+00 : f32
    %18 = vector.broadcast %cst_6 : f32 to vector<4x128xf32>
    %19 = vector.broadcast %cst_7 : f32 to vector<4x128xf32>
    %20 = arith.select %17, %18, %19 : vector<4x128xi1>, vector<4x128xf32>
    %21 = arith.mulf %14, %20 : vector<4x128xf32>
    %cst_8 = arith.constant dense<0.000000e+00> : vector<4xf32>
    %22 = vector.multi_reduction <add>, %21, %cst_8 [1] : vector<4x128xf32> to vector<4xf32>
    %23 = vector.shape_cast %22 : vector<4xf32> to vector<4x1xf32>
    %cst_9 = arith.constant dense<0.000000e+00> : vector<4xf32>
    %24 = vector.multi_reduction <add>, %14, %cst_9 [1] : vector<4x128xf32> to vector<4xf32>
    %25 = vector.shape_cast %24 : vector<4xf32> to vector<4x1xf32>
    %cst_10 = arith.constant dense<0.000000e+00> : vector<4xf32>
    %26 = vector.multi_reduction <add>, %20, %cst_10 [1] : vector<4x128xf32> to vector<4xf32>
    %27 = vector.shape_cast %26 : vector<4xf32> to vector<4x1xf32>
    %28 = vector.broadcast %11 : vector<1x128xf32> to vector<4x128xf32>
    %29 = arith.subf %28, %7 : vector<4x128xf32>
    %cst_11 = arith.constant 0.000000e+00 : f32
    %30 = vector.broadcast %cst_11 : f32 to vector<4x128xf32>
    %31 = arith.select %17, %29, %30 : vector<4x128xi1>, vector<4x128xf32>
    %cst_12 = arith.constant dense<0.000000e+00> : vector<4xf32>
    %32 = vector.multi_reduction <add>, %31, %cst_12 [1] : vector<4x128xf32> to vector<4xf32>
    %33 = vector.shape_cast %32 : vector<4xf32> to vector<4x1xf32>
    %34 = tpu.concatenate %23, %25, %27, %33 in 1 : vector<4x1xf32>, vector<4x1xf32>, vector<4x1xf32>, vector<4x1xf32> -> vector<4x4xf32>
    %c0_i32 = arith.constant 0 : i32
    %35 = arith.cmpi eq, %arg1, %c0_i32 : i32
    %36 = arith.extui %35 : i1 to i32
    %c0_i32_13 = arith.constant 0 : i32
    %37 = arith.cmpi ne, %36, %c0_i32_13 : i32
    scf.if %37 {
      %cst_20 = arith.constant 0.000000e+00 : f32
      %44 = vector.broadcast %cst_20 : f32 to vector<1x4x4xf32>
      %c0_21 = arith.constant 0 : index
      %c0_22 = arith.constant 0 : index
      %c0_23 = arith.constant 0 : index
      %45 = vector.load %arg4[%c0_21, %c0_22, %c0_23] : memref<1x4x4xf32, #tpu.memory_space<vmem>>, vector<1x4x4xf32>
      tpu.vector_store %arg4[%c0_21, %c0_22, %c0_23], %44 {strides = array<i32>} : memref<1x4x4xf32, #tpu.memory_space<vmem>>, vector<1x4x4xf32>,
    } else {
    }
    %c0_14 = arith.constant 0 : index
    %c0_15 = arith.constant 0 : index
    %c0_16 = arith.constant 0 : index
    %38 = vector.load %arg4[%c0_14, %c0_15, %c0_16] : memref<1x4x4xf32, #tpu.memory_space<vmem>>, vector<1x4x4xf32>
    %39 = vector.shape_cast %38 : vector<1x4x4xf32> to vector<4x4xf32>
    %40 = arith.addf %39, %34 : vector<4x4xf32>
    %c0_17 = arith.constant 0 : index
    %c0_18 = arith.constant 0 : index
    %c0_19 = arith.constant 0 : index
    %41 = vector.load %arg4[%c0_17, %c0_18, %c0_19] : memref<1x4x4xf32, #tpu.memory_space<vmem>>, vector<1x4x4xf32>
    %42 = vector.shape_cast %41 : vector<1x4x4xf32> to vector<4x4xf32>
    %43 = vector.shape_cast %40 : vector<4x4xf32> to vector<1x4x4xf32>
    tpu.vector_store %arg4[%c0_17, %c0_18, %c0_19], %43 {strides = array<i32>} : memref<1x4x4xf32, #tpu.memory_space<vmem>>, vector<1x4x4xf32>,
    return
  }
  func.func @transform_0(%arg0: i32, %arg1: i32) -> (i32, i32, i32) {
    %c0_i32 = arith.constant 0 : i32
    %c0_i32_0 = arith.constant 0 : i32
    return %arg0, %c0_i32, %arg1 : i32, i32, i32
  }
  func.func @transform_1(%arg0: i32, %arg1: i32) -> (i32, i32, i32) {
    %c0_i32 = arith.constant 0 : i32
    %c0_i32_0 = arith.constant 0 : i32
    return %arg0, %c0_i32, %arg1 : i32, i32, i32
  }
  func.func @transform_2(%arg0: i32, %arg1: i32) -> (i32, i32, i32) {
    %c0_i32 = arith.constant 0 : i32
    %c0_i32_0 = arith.constant 0 : i32
    %c0_i32_1 = arith.constant 0 : i32
    return %arg0, %c0_i32, %c0_i32_0 : i32, i32, i32
  }
}

</mosaic_0001>

<llo_original>
// kernel: tpu_custom_call.1
$region0: #{tpu_custom_call.1}
  #allocation0 [shape = 'u32[]', space=smem, size = 0x4, offset = 0x4, fixed_abs, tag = 'smem constant byte address 0x4 - core index']
  #allocation1 [shape = 'u32[72,128]{1,0:T(1,128)}', space=vmem, size = 0x9000, scoped, tag = 'internal scratch']
  %s0 = inlined_call_operand.hbm [shape: f32[2,4,256], index: 0, kind: input, shape index: {}]
  %s1 = inlined_call_operand.hbm [shape: s32[2,1,256], index: 1, kind: input, shape index: {}]
  %s2 = inlined_call_operand.hbm [shape: f32[2,4,4], index: 2, kind: output, shape index: {}]
  %s3 = sld [smem:[#allocation0]]
  $region53: #{tpu_custom_call.1} parent=0
    _
  %s5 = ssub.s32 1, %s3
  %s6 = scalar_select 0, %s5, %s3
  $region1: #{tpu_custom_call.1} parent=0
    #allocation2 [shape = 'u8[4096]{0}', space=vmem, size = 0x1000, scoped, tag = 'input window, operand 0']
    #allocation3 [shape = 's32[2]{0}', space=sflag, size = 0x8, scoped, tag = 'scoped memory for tpu_custom_call.1']
    #allocation4 [shape = 's32[2]{0}', space=sflag, size = 0x8, scoped, tag = 'scoped memory for tpu_custom_call.1']
    #allocation5 [shape = 'u8[1024]{0}', space=vmem, size = 0x400, scoped, tag = 'input window, operand 1']
    #allocation6 [shape = 's32[2]{0}', space=sflag, size = 0x8, scoped, tag = 'scoped memory for tpu_custom_call.1']
    #allocation7 [shape = 'u8[4096]{0}', space=vmem, size = 0x1000, scoped, tag = 'output window, operand 0']
    %7 = vsyncpa [#allocation3], 0
    %s8 = scalar_lea.sflag [#allocation3], 1
    %9 = vsyncpa %s8, 0
    %10 = vsyncpa [#allocation6], 0
    %s11 = scalar_lea.sflag [#allocation6], 1
    %12 = vsyncpa %s11, 0
    %13 = vsyncpa [#allocation4], 0
    %s14 = scalar_lea.sflag [#allocation4], 1
    %15 = vsyncpa %s14, 0
    loop: start=0, step=1, limit=6
    $region2: #{tpu_custom_call.1} parent=1 // loop_pre_header
      _
    $region3: #{tpu_custom_call.1} parent=1 // loop_header
      %s17 = sphi 0, %s21
      %p18 = scmp.ge.s32.totalorder %s17, 6
      %s24 = sphi 0, %s36
      %s25 = sphi 0, %s32
      %s26 = sphi 0, %s24
      %s27 = sphi 0, %s25
      %s28 = sphi 0, %s26
      %s29 = sphi 0, %s27
      %s41 = sphi 0, %s43
      %s44 = sphi 0, %s41
      %s45 = sphi 0, %s44
      %s61 = sphi 0, %s45
      %s69 = sphi 0, %s71
      %s72 = sphi 0, %s69
      %s73 = sphi 0, %s72
      %s89 = sphi 0, %s73
      %s95 = sphi 0, %s97
      %s98 = sphi 0, %s95
      %s99 = sphi 0, %s98
      %s115 = sphi 0, %s99
    $region4: #{tpu_custom_call.1} parent=1 // loop_header_branch
      %20 = sbr.rel (%p18) target = $region8
    $region5: #{tpu_custom_call.1} parent=1 // loop_body
      %s22 = ssub.s32 %s17, 1
      %s23 = ssub.s32 %s17, 2
      %s30 = sadd.s32 1, %s25
      %p31 = scmp.ge.s32.totalorder %s30, 2
      %s32 = scalar_select %p31, 0, %s30
      %s33 = sadd.s32 1, %s24
      %s34 = scalar_select %p31, %s33, %s24
      %p35 = scmp.ge.s32.totalorder %s34, 2
      %s36 = scalar_select %p35, 0, %s34
      %s37 = ssub.s32 %s24, %s36
      %s38 = ssub.s32 %s25, %s32
      %s39 = sor.u32 %s37, %s38
      %p40 = scmp.eq.s32.totalorder %s39, 0
      %s42 = sadd.s32 %s41, 1
      %s43 = scalar_select %p40, %s41, %s42
      %p46 = pneg %p40
      %p47 = scmp.eq.s32.totalorder %s17, 3
      %p48 = por %p46, %p47
      %p49 = scmp.ne.s32.totalorder %s41, %s44
      %p50 = scmp.eq.s32.totalorder %s17, 0
      %p51 = por %p49, %p50
      %p52 = scmp.ne.s32.totalorder %s41, %s44
      %p53 = scmp.eq.s32.totalorder %s22, 3
      %p54 = por %p52, %p53
      %p55 = scmp.ne.s32.totalorder %s44, %s45
      %p56 = scmp.eq.s32.totalorder %s22, 0
      %p57 = por %p55, %p56
      %p58 = scmp.ne.s32.totalorder %s44, %s45
      %p59 = scmp.eq.s32.totalorder %s23, 3
      %p60 = por %p58, %p59
      %p62 = scmp.ne.s32.totalorder %s45, %s61
      %p63 = scmp.eq.s32.totalorder %s23, 0
      %p64 = por %p62, %p63
      %s65 = ssub.s32 %s24, %s36
      %s66 = ssub.s32 %s25, %s32
      %s67 = sor.u32 %s65, %s66
      %p68 = scmp.eq.s32.totalorder %s67, 0
      %s70 = sadd.s32 %s69, 1
      %s71 = scalar_select %p68, %s69, %s70
      %p74 = pneg %p68
      %p75 = scmp.eq.s32.totalorder %s17, 3
      %p76 = por %p74, %p75
      %p77 = scmp.ne.s32.totalorder %s69, %s72
      %p78 = scmp.eq.s32.totalorder %s17, 0
      %p79 = por %p77, %p78
      %p80 = scmp.ne.s32.totalorder %s69, %s72
      %p81 = scmp.eq.s32.totalorder %s22, 3
      %p82 = por %p80, %p81
      %p83 = scmp.ne.s32.totalorder %s72, %s73
      %p84 = scmp.eq.s32.totalorder %s22, 0
      %p85 = por %p83, %p84
      %p86 = scmp.ne.s32.totalorder %s72, %s73
      %p87 = scmp.eq.s32.totalorder %s23, 3
      %p88 = por %p86, %p87
      %p90 = scmp.ne.s32.totalorder %s73, %s89
      %p91 = scmp.eq.s32.totalorder %s23, 0
      %p92 = por %p90, %p91
      %s93 = ssub.s32 %s24, %s36
      %p94 = scmp.eq.s32.totalorder %s93, 0
      %s96 = sadd.s32 %s95, 1
      %s97 = scalar_select %p94, %s95, %s96
      %p100 = pneg %p94
      %p101 = scmp.eq.s32.totalorder %s17, 3
      %p102 = por %p100, %p101
      %p103 = scmp.ne.s32.totalorder %s95, %s98
      %p104 = scmp.eq.s32.totalorder %s17, 0
      %p105 = por %p103, %p104
      %p106 = scmp.ne.s32.totalorder %s95, %s98
      %p107 = scmp.eq.s32.totalorder %s22, 3
      %p108 = por %p106, %p107
      %p109 = scmp.ne.s32.totalorder %s98, %s99
      %p110 = scmp.eq.s32.totalorder %s22, 0
      %p111 = por %p109, %p110
      %p112 = scmp.ne.s32.totalorder %s98, %s99
      %p113 = scmp.eq.s32.totalorder %s23, 3
      %p114 = por %p112, %p113
      %p116 = scmp.ne.s32.totalorder %s99, %s115
      %p117 = scmp.eq.s32.totalorder %s23, 0
      %p118 = por %p116, %p117
      %p119 = scmp.le.s32.totalorder 1, %s17
      %p120 = scmp.lt.s32.totalorder %s17, 5
      %p121 = pnand %p119, %p120
      %p122 = pneg %p121
      // Predicated region
      $region9: #{tpu_custom_call.1} parent=5 // pred_check
        _
      $region10: #{tpu_custom_call.1} parent=5 // pred_check_branch
        %124 = sbr.rel (%p121) target = $region12
      $region11: #{tpu_custom_call.1} parent=5 // pred_region
        %s125 = ssub.s32 %s17, 1
      $region12: #{tpu_custom_call.1} parent=5 // pred_fallthru
        _
      %p126 = scmp.lt.s32.totalorder %s17, 4
      // Predicated region
      $region13: #{tpu_custom_call.1} parent=5 // pred_check
        %p127 = pneg %p126
      $region14: #{tpu_custom_call.1} parent=5 // pred_check_branch
        %129 = sbr.rel (%p127) target = $region16
      $region15: #{tpu_custom_call.1} parent=5 // pred_region
        // Predicated region
        $region17: #{tpu_custom_call.1} parent=15 // pred_check
          %p130 = pneg %p51
        $region18: #{tpu_custom_call.1} parent=15 // pred_check_branch
          %132 = sbr.rel (%p130) target = $region20
        $region19: #{tpu_custom_call.1} parent=15 // pred_region
          %s133 = sand.u32 %s41, 1
          %s134 = scalar_lea.sflag [#allocation3], %s133
          %s135 = sand.u32 %s41, 1
          %s136 = smul.addr %s135, 4
          %s137 = scalar_lea.vmem [#allocation2], %s136
          %139 = vsyncadd %s134, 0
          %s140 = smul.addr %s24, 2
          %s141 = sadd.s32 %s25, %s140
          %s142 = smul.addr %s141, 4
          %s143 = scalar_lea.hbm %s0, %s142
          %s145 = sshll.u32 %s143, 4
          %s146 = int_to_ptr.hbm [resolvable:$true] %s145
          %s147 = sshll.u32 %s137, 4
          %s148 = int_to_ptr.vmem [resolvable:$true] %s147
          %150 = dma.hbm_to_vmem [thread:$0]  %s146, 64, %s148, %s134
        $region20: #{tpu_custom_call.1} parent=15 // pred_fallthru
          _
        // Predicated region
        $region21: #{tpu_custom_call.1} parent=15 // pred_check
          %p151 = pneg %p79
        $region22: #{tpu_custom_call.1} parent=15 // pred_check_branch
          %153 = sbr.rel (%p151) target = $region24
        $region23: #{tpu_custom_call.1} parent=15 // pred_region
          %s154 = sand.u32 %s69, 1
          %s155 = scalar_lea.sflag [#allocation6], %s154
          %s156 = sand.u32 %s69, 1
          %s157 = scalar_lea.vmem [#allocation5], %s156
          %159 = vsyncadd %s155, 0
          %s160 = smul.addr %s24, 2
          %s161 = sadd.s32 %s25, %s160
          %s162 = scalar_lea.hbm %s1, %s161
          %s164 = sshll.u32 %s162, 4
          %s165 = int_to_ptr.hbm [resolvable:$true] %s164
          %s166 = sshll.u32 %s157, 4
          %s167 = int_to_ptr.vmem [resolvable:$true] %s166
          %169 = dma.hbm_to_vmem [thread:$0]  %s165, 16, %s167, %s155
        $region24: #{tpu_custom_call.1} parent=15 // pred_fallthru
          _
      $region16: #{tpu_custom_call.1} parent=5 // pred_fallthru
        _
      %p170 = scmp.le.s32.totalorder 1, %s17
      %p171 = scmp.lt.s32.totalorder %s17, 5
      %p172 = pnand %p170, %p171
      %p173 = pneg %p172
      // Predicated region
      $region25: #{tpu_custom_call.1} parent=5 // pred_check
        _
      $region26: #{tpu_custom_call.1} parent=5 // pred_check_branch
        %175 = sbr.rel (%p172) target = $region28
      $region27: #{tpu_custom_call.1} parent=5 // pred_region
        %s176 = ssub.s32 %s17, 1
        %s177 = sand.u32 %s44, 1
        %s178 = scalar_lea.sflag [#allocation3], %s177
        %s179 = sand.u32 %s44, 1
        %s180 = smul.addr %s179, 4
        %s181 = scalar_lea.vmem [#allocation2], %s180
        // Predicated region
        $region29: #{tpu_custom_call.1} parent=27 // pred_check
          %p182 = pneg %p57
        $region30: #{tpu_custom_call.1} parent=27 // pred_check_branch
          %184 = sbr.rel (%p182) target = $region32
        $region31: #{tpu_custom_call.1} parent=27 // pred_region
          %186 = dma.done %s178, 64
        $region32: #{tpu_custom_call.1} parent=27 // pred_fallthru
          _
        %s187 = sand.u32 %s72, 1
        %s188 = scalar_lea.sflag [#allocation6], %s187
        %s189 = sand.u32 %s72, 1
        %s190 = scalar_lea.vmem [#allocation5], %s189
        // Predicated region
        $region33: #{tpu_custom_call.1} parent=27 // pred_check
          %p191 = pneg %p85
        $region34: #{tpu_custom_call.1} parent=27 // pred_check_branch
          %193 = sbr.rel (%p191) target = $region36
        $region35: #{tpu_custom_call.1} parent=27 // pred_region
          %195 = dma.done %s188, 16
        $region36: #{tpu_custom_call.1} parent=27 // pred_fallthru
          _
        %s196 = sand.u32 %s44, 1
        %s197 = scalar_lea.sflag [#allocation3], %s196
        %s198 = sand.u32 %s44, 1
        %s199 = smul.addr %s198, 4
        %s200 = scalar_lea.vmem [#allocation2], %s199
        %p201 = pneg %p57
        %p202 = pneg %p54
        %s203 = sand.u32 %s72, 1
        %s204 = scalar_lea.sflag [#allocation6], %s203
        %s205 = sand.u32 %s72, 1
        %s206 = scalar_lea.vmem [#allocation5], %s205
        %p207 = pneg %p85
        %p208 = pneg %p82
        %p209 = pneg %p111
        %p210 = pneg %p108
        %s211 = sand.u32 %s98, 1
        %s212 = scalar_lea.sflag [#allocation4], %s211
        %s213 = sand.u32 %s98, 1
        %s214 = smul.addr %s213, 4
        %s215 = scalar_lea.vmem [#allocation7], %s214
        %v216 = vld [vmem:[%s181] sm:$0xf]
        %v217 = vld [vmem:[%s190] sm:$0x1]
        %vm218 = vcmask 1043456
        %v219 = vsel %vm218, %v216, -inf
        %v220 = vrot.slane %v219, 4
        %v221 = vmax.f32 %v219, %v220
        %v222 = vrot.slane %v221, 2
        %v223 = vmax.f32 %v221, %v222
        %v224 = vrot.slane %v223, 1
        %v225 = vmax.f32 %v223, %v224
        %v226 = vsub.f32 %v216, %v225
        %v227 = vmul.f32 %v226, 1.442695
        %v228 = vpow.pop %v227
        %v229 = vsel %vm218, %v228, 0.0
        %v230 = vrot.slane %v229, 4
        %v231 = vadd.f32 %v229, %v230
        %v232 = vrot.slane %v231, 2
        %v233 = vadd.f32 %v231, %v232
        %v234 = vrot.slane %v233, 1
        %v235 = vadd.f32 %v233, %v234
        %v236 = vlog2.pop %v235
        %v237 = vmul.f32 %v236, 0.6931472
        %v238 = vrcp.pop %v235
        %v239 = vmul.f32 %v235, %v238
        %v240 = vsub.f32 1.0, %v239
        %v241 = vmul.f32 %v238, %v240
        %v242 = vadd.f32 %v238, %v241
        %vm243 = vweird.f32 %v235
        %vm244 = vweird.f32 %v238
        %vm245 = vmor %vm243, %vm244
        %v246 = vsel %vm245, %v238, %v242
        %v247 = vand.u32 2147483647, %v235
        %vm248 = vcmp.eq.f32.partialorder %v247, 8.507059e+37
        %v249 = vand.u32 %v235, 2147483648
        %v250 = vor.u32 1.1754944e-38, %v249
        %v251 = vsel %vm248, %v250, %v246
        %v252 = vmul.f32 %v228, %v251
        %v253 = vlaneseq
        %v254 = vshrl.u32 %v253, 7
        %v255 = vperm.slane %v217, 0
        %vm256 = vcmp.eq.s32.totalorder %v254, %v255
        %v257 = vsel %vm256, 1.0, 0.0
        %v258 = vmul.f32 %v252, %v257
        %v259 = vsel %vm218, %v258, 0.0
        %260 = vadd.xlane.f32.xlu0 %v259
        %v261 = vpop.xlane.xlu0 %260
        %v262 = vsel %vm218, %v252, 0.0
        %263 = vadd.xlane.f32.xlu0 %v262
        %v264 = vpop.xlane.xlu0 %263
        %v265 = vsel %vm218, %v257, 0.0
        %266 = vadd.xlane.f32.xlu0 %v265
        %v267 = vpop.xlane.xlu0 %266
        %v268 = vsub.f32 %v237, %v226
        %v269 = vsel %vm256, %v268, 0.0
        %v270 = vsel %vm218, %v269, 0.0
        %271 = vadd.xlane.f32.xlu0 %v270
        %v272 = vpop.xlane.xlu0 %271
        %vm273 = vcmask 7168
        %v274 = vsel %vm273, %v261, %v264
        %vm275 = vcmask 15360
        %v276 = vsel %vm275, %v274, %v267
        %vm277 = vcmask 23552
        %v278 = vsel %vm277, %v276, %v272
        %p279 = scmp.eq.s32.totalorder %s27, 0
        // Predicated region
        $region37: #{tpu_custom_call.1} parent=27 // pred_check
          %p280 = pneg %p279
        $region38: #{tpu_custom_call.1} parent=27 // pred_check_branch
          %282 = sbr.rel (%p280) target = $region40
        $region39: #{tpu_custom_call.1} parent=27 // pred_region
          %vm283 = vcmask 27648
          %284 = vst.msk [vmem:[%s215] sm:$0xf] %vm283, 0.0
        $region40: #{tpu_custom_call.1} parent=27 // pred_fallthru
          _
        %v285 = vld [vmem:[%s215] sm:$0xf]
        %v286 = vadd.f32 %v285, %v278
        %vm287 = vcmask 27648
        %288 = vst.msk [vmem:[%s215] sm:$0xf] %vm287, %v286
        %s289 = sand.u32 %s98, 1
        %s290 = scalar_lea.sflag [#allocation4], %s289
        %s291 = sand.u32 %s98, 1
        %s292 = smul.addr %s291, 4
        %s293 = scalar_lea.vmem [#allocation7], %s292
        // Predicated region
        $region41: #{tpu_custom_call.1} parent=27 // pred_check
          %p294 = pneg %p108
        $region42: #{tpu_custom_call.1} parent=27 // pred_check_branch
          %296 = sbr.rel (%p294) target = $region44
        $region43: #{tpu_custom_call.1} parent=27 // pred_region
          %298 = vsyncadd %s290, 0
          %s299 = smul.addr %s26, 4
          %s300 = scalar_lea.hbm %s2, %s299
          %s302 = sshll.u32 %s293, 4
          %s303 = int_to_ptr.vmem [resolvable:$true] %s302
          %s304 = sshll.u32 %s300, 4
          %s305 = int_to_ptr.hbm [resolvable:$true] %s304
          %307 = dma.vmem_to_hbm [thread:$0]  %s303, 64, %s305, %s290
        $region44: #{tpu_custom_call.1} parent=27 // pred_fallthru
          _
      $region28: #{tpu_custom_call.1} parent=5 // pred_fallthru
        _
      %p308 = scmp.le.s32.totalorder 2, %s17
      // Predicated region
      $region45: #{tpu_custom_call.1} parent=5 // pred_check
        %p309 = pneg %p308
      $region46: #{tpu_custom_call.1} parent=5 // pred_check_branch
        %311 = sbr.rel (%p309) target = $region48
      $region47: #{tpu_custom_call.1} parent=5 // pred_region
        %s312 = ssub.s32 %s17, 2
        // Predicated region
        $region49: #{tpu_custom_call.1} parent=47 // pred_check
          %p313 = pneg %p114
        $region50: #{tpu_custom_call.1} parent=47 // pred_check_branch
          %315 = sbr.rel (%p313) target = $region52
        $region51: #{tpu_custom_call.1} parent=47 // pred_region
          %s316 = sand.u32 %s99, 1
          %s317 = scalar_lea.sflag [#allocation4], %s316
          %s318 = sand.u32 %s99, 1
          %s319 = smul.addr %s318, 4
          %s320 = scalar_lea.vmem [#allocation7], %s319
          %322 = dma.done %s317, 64
        $region52: #{tpu_custom_call.1} parent=47 // pred_fallthru
          _
      $region48: #{tpu_custom_call.1} parent=5 // pred_fallthru
        _
    $region6: #{tpu_custom_call.1} parent=1 // loop_footer
      %s21 = sadd.s32 1, %s17
    $region7: #{tpu_custom_call.1} parent=1 // loop_footer_branch
      %16 = sbr.rel target = $region3
    $region8: #{tpu_custom_call.1} parent=1 // loop_exit
      _
    %323 = vsyncpa [#allocation3], 1
    %s324 = scalar_lea.sflag [#allocation3], 1
    %325 = vsyncpa %s324, 1
    %326 = vsyncpa [#allocation6], 1
    %s327 = scalar_lea.sflag [#allocation6], 1
    %328 = vsyncpa %s327, 1
    %329 = vsyncpa [#allocation4], 1
    %s330 = scalar_lea.sflag [#allocation4], 1
    %331 = vsyncpa %s330, 1

</llo_original>
